<compile_context>
chip_gen: v5e
topology: v5e:2x2
jax: 0.10.0
libtpu: 0.0.40
codegen_flags: <defaults>
</compile_context>

<pallas_src>
import jax
import jax.numpy as jnp
from jax.experimental import pallas as pl
from jax.experimental.pallas import tpu as pltpu


def _round_up(x, m):
    return (x + m - 1) // m * m


def ffn_kernel(x_ref, w1_ref, b1_ref, w2_ref, b2_ref, o_ref):
    # x_ref:  (bm, C)   row-block of the flattened input
    # w1_ref: (C, H)    pre-transposed first Linear weight (resident)
    # b1_ref: (1, H)
    # w2_ref: (H, C)    pre-transposed second Linear weight (resident)
    # b2_ref: (1, C)
    x = x_ref[...]
    h = jnp.dot(x, w1_ref[...], preferred_element_type=jnp.float32) + b1_ref[...]
    h = jnp.maximum(h, 0.0)  # ReLU
    # TODO(synk): nn.Dropout is identity in eval mode; train-mode stochastic masking
    # (pltpu.prng_seed + prng_random_bits) not implemented here.
    y = jnp.dot(h, w2_ref[...], preferred_element_type=jnp.float32) + b2_ref[...]
    o_ref[...] = y.astype(o_ref.dtype)


def feed_forward(x, w1, b1, w2, b2, block_rows=None):
    """x: (..., dim); w1: (hidden, dim); b1: (hidden,); w2: (dim, hidden); b2: (dim,).

    Weight layouts follow PyTorch nn.Linear: weight is (out_features, in_features).
    """
    *lead, C = x.shape
    H = w1.shape[0]
    M = 1
    for d in lead:
        M *= d

    # Fold all leading dims into one row dimension (fills the MXU, amortizes grid overhead).
    x2 = x.reshape(M, C)

    # Host-side weight pre-transpose / bias reshape (one-time; no in-kernel relayout).
    w1t = jnp.asarray(w1).T          # (C, H)
    w2t = jnp.asarray(w2).T          # (H, C)
    b1r = jnp.asarray(b1).reshape(1, H)
    b2r = jnp.asarray(b2).reshape(1, C)

    # Row-block size: big MXU-friendly tiles at scale, whole problem in one step when small.
    if block_rows is None:
        block_rows = 256 if M >= 256 else max(_round_up(M, 8), 8)
    Mp = _round_up(M, block_rows)
    if Mp != M:
        x2 = jnp.pad(x2, ((0, Mp - M), (0, 0)))

    grid = (Mp // block_rows,)

    out = pl.pallas_call(
        ffn_kernel,
        out_shape=jax.ShapeDtypeStruct((Mp, C), x.dtype),
        grid_spec=pltpu.PrefetchScalarGridSpec(
            num_scalar_prefetch=0,
            grid=grid,
            in_specs=[
                pl.BlockSpec((block_rows, C), lambda i: (i, 0)),   # x row-block (streamed)
                pl.BlockSpec((C, H), lambda i: (0, 0)),            # W1^T (VMEM-resident)
                pl.BlockSpec((1, H), lambda i: (0, 0)),            # b1   (VMEM-resident)
                pl.BlockSpec((H, C), lambda i: (0, 0)),            # W2^T (VMEM-resident)
                pl.BlockSpec((1, C), lambda i: (0, 0)),            # b2   (VMEM-resident)
            ],
            out_specs=pl.BlockSpec((block_rows, C), lambda i: (i, 0)),
        ),
        compiler_params=pltpu.CompilerParams(
            dimension_semantics=("parallel",)),
    )(x2, w1t, b1r, w2t, b2r)

    if Mp != M:
        out = out[:M]
    return out.reshape(*lead, C)


def reference_feed_forward(x, w1, b1, w2, b2):
    h = jnp.einsum('...c,hc->...h', x, w1) + b1
    h = jnp.maximum(h, 0.0)
    return jnp.einsum('...h,ch->...c', h, w2) + b2


if __name__ == "__main__":
    B, T, dim = 2, 8, 32
    hidden = 4 * dim

    key = jax.random.PRNGKey(0)
    k_x, k_w1, k_b1, k_w2, k_b2 = jax.random.split(key, 5)

    x = jax.random.normal(k_x, (B, T, dim), dtype=jnp.float32)
    # PyTorch nn.Linear layouts: weight (out_features, in_features), bias (out_features,)
    w1 = jax.random.normal(k_w1, (hidden, dim), dtype=jnp.float32) * 0.05
    b1 = jax.random.normal(k_b1, (hidden,), dtype=jnp.float32) * 0.05
    w2 = jax.random.normal(k_w2, (dim, hidden), dtype=jnp.float32) * 0.05
    b2 = jax.random.normal(k_b2, (dim,), dtype=jnp.float32) * 0.05

    out = feed_forward(x, w1, b1, w2, b2)
    out = jax.block_until_ready(out)

    ref = reference_feed_forward(x, w1, b1, w2, b2)
    assert out.shape == (B, T, dim), f"bad shape {out.shape}"
    assert jnp.allclose(out, ref, atol=1e-4, rtol=1e-4), "mismatch vs JAX reference"

    print("KERNEL_OK")
</pallas_src>

<mosaic_0001>
module attributes {stable_mosaic.version = 11 : i64} {
  func.func @ffn_kernel(%arg0: i32, %arg1: memref<16x32xf32, #tpu.memory_space<vmem>>, %arg2: memref<32x128xf32, #tpu.memory_space<vmem>>, %arg3: memref<1x128xf32, #tpu.memory_space<vmem>>, %arg4: memref<128x32xf32, #tpu.memory_space<vmem>>, %arg5: memref<1x32xf32, #tpu.memory_space<vmem>>, %arg6: memref<16x32xf32, #tpu.memory_space<vmem>>) attributes {dimension_semantics = [#tpu.dimension_semantics<parallel>], iteration_bounds = array<i64: 1>, scalar_prefetch = 0 : i64, scratch_operands = 0 : i64, tpu.core_type = #tpu.core_type<tc>, window_params = [{transform_indices = @transform_0, window_bounds = array<i64: 16, 32>}, {pipeline_mode = #tpu.pipeline_mode<synchronous>, transform_indices = @transform_1, window_bounds = array<i64: 32, 128>}, {pipeline_mode = #tpu.pipeline_mode<synchronous>, transform_indices = @transform_2, window_bounds = array<i64: 1, 128>}, {pipeline_mode = #tpu.pipeline_mode<synchronous>, transform_indices = @transform_3, window_bounds = array<i64: 128, 32>}, {pipeline_mode = #tpu.pipeline_mode<synchronous>, transform_indices = @transform_4, window_bounds = array<i64: 1, 32>}, {transform_indices = @transform_5, window_bounds = array<i64: 16, 32>}]} {
    %c0 = arith.constant 0 : index
    %c0_0 = arith.constant 0 : index
    %0 = vector.load %arg1[%c0, %c0_0] : memref<16x32xf32, #tpu.memory_space<vmem>>, vector<16x32xf32>
    %c0_1 = arith.constant 0 : index
    %c0_2 = arith.constant 0 : index
    %1 = vector.load %arg2[%c0_1, %c0_2] : memref<32x128xf32, #tpu.memory_space<vmem>>, vector<32x128xf32>
    %cst = arith.constant dense<0.000000e+00> : vector<16x128xf32>
    %2 = tpu.matmul %0, %1, %cst {dimension_numbers = #tpu.dot_dimension_numbers<[1], [0], [0], [1], [0, 0, 1, 1], [], []>} : vector<16x32xf32>, vector<32x128xf32>, vector<16x128xf32> -> vector<16x128xf32>
    %c0_3 = arith.constant 0 : index
    %c0_4 = arith.constant 0 : index
    %3 = vector.load %arg3[%c0_3, %c0_4] : memref<1x128xf32, #tpu.memory_space<vmem>>, vector<1x128xf32>
    %4 = vector.broadcast %3 : vector<1x128xf32> to vector<16x128xf32>
    %5 = arith.addf %2, %4 : vector<16x128xf32>
    %cst_5 = arith.constant 0.000000e+00 : f32
    %6 = vector.broadcast %cst_5 : f32 to vector<16x128xf32>
    %7 = arith.maximumf %5, %6 : vector<16x128xf32>
    %c0_6 = arith.constant 0 : index
    %c0_7 = arith.constant 0 : index
    %8 = vector.load %arg4[%c0_6, %c0_7] : memref<128x32xf32, #tpu.memory_space<vmem>>, vector<128x32xf32>
    %cst_8 = arith.constant dense<0.000000e+00> : vector<16x32xf32>
    %9 = tpu.matmul %7, %8, %cst_8 {dimension_numbers = #tpu.dot_dimension_numbers<[1], [0], [0], [1], [0, 0, 1, 1], [], []>} : vector<16x128xf32>, vector<128x32xf32>, vector<16x32xf32> -> vector<16x32xf32>
    %c0_9 = arith.constant 0 : index
    %c0_10 = arith.constant 0 : index
    %10 = vector.load %arg5[%c0_9, %c0_10] : memref<1x32xf32, #tpu.memory_space<vmem>>, vector<1x32xf32>
    %11 = vector.broadcast %10 : vector<1x32xf32> to vector<16x32xf32>
    %12 = arith.addf %9, %11 : vector<16x32xf32>
    %c0_11 = arith.constant 0 : index
    %c0_12 = arith.constant 0 : index
    %13 = vector.load %arg6[%c0_11, %c0_12] : memref<16x32xf32, #tpu.memory_space<vmem>>, vector<16x32xf32>
    tpu.vector_store %arg6[%c0_11, %c0_12], %12 {strides = array<i32>} : memref<16x32xf32, #tpu.memory_space<vmem>>, vector<16x32xf32>,
    return
  }
  func.func @transform_0(%arg0: i32) -> (i32, i32) {
    %c0_i32 = arith.constant 0 : i32
    %c0_i32_0 = arith.constant 0 : i32
    return %arg0, %c0_i32 : i32, i32
  }
  func.func @transform_1(%arg0: i32) -> (i32, i32) {
    %c0_i32 = arith.constant 0 : i32
    %c0_i32_0 = arith.constant 0 : i32
    %c0_i32_1 = arith.constant 0 : i32
    return %c0_i32, %c0_i32_0 : i32, i32
  }
  func.func @transform_2(%arg0: i32) -> (i32, i32) {
    %c0_i32 = arith.constant 0 : i32
    %c0_i32_0 = arith.constant 0 : i32
    %c0_i32_1 = arith.constant 0 : i32
    return %c0_i32, %c0_i32_0 : i32, i32
  }
  func.func @transform_3(%arg0: i32) -> (i32, i32) {
    %c0_i32 = arith.constant 0 : i32
    %c0_i32_0 = arith.constant 0 : i32
    %c0_i32_1 = arith.constant 0 : i32
    return %c0_i32, %c0_i32_0 : i32, i32
  }
  func.func @transform_4(%arg0: i32) -> (i32, i32) {
    %c0_i32 = arith.constant 0 : i32
    %c0_i32_0 = arith.constant 0 : i32
    %c0_i32_1 = arith.constant 0 : i32
    return %c0_i32, %c0_i32_0 : i32, i32
  }
  func.func @transform_5(%arg0: i32) -> (i32, i32) {
    %c0_i32 = arith.constant 0 : i32
    %c0_i32_0 = arith.constant 0 : i32
    return %arg0, %c0_i32 : i32, i32
  }
}

</mosaic_0001>

<llo_original>
// kernel: tpu_custom_call.1
$region0: #{tpu_custom_call.1}
  #allocation0 [shape = 'u32[]', space=smem, size = 0x4, offset = 0x4, fixed_abs, tag = 'smem constant byte address 0x4 - core index']
  #allocation1 [shape = 'u32[72,128]{1,0:T(1,128)}', space=vmem, size = 0x9000, scoped, tag = 'internal scratch']
  %s0 = inlined_call_operand.vmem [shape: f32[16,32], index: 0, kind: input, shape index: {}]
  %s1 = inlined_call_operand.vmem [shape: f32[32,128], index: 1, kind: input, shape index: {}]
  %s2 = inlined_call_operand.vmem [shape: f32[1,128], index: 2, kind: input, shape index: {}]
  %s3 = inlined_call_operand.vmem [shape: f32[128,32], index: 3, kind: input, shape index: {}]
  %s4 = inlined_call_operand.vmem [shape: f32[1,32], index: 4, kind: input, shape index: {}]
  %s5 = inlined_call_operand.hbm [shape: f32[16,32], index: 5, kind: output, shape index: {}]
  %s6 = sld [smem:[#allocation0]]
  $region30: #{tpu_custom_call.1} parent=0
    _
  %s8 = ssub.s32 1, %s6
  %s9 = scalar_select 0, %s8, %s6
  $region1: #{tpu_custom_call.1} parent=0
    #allocation2 [shape = 'u8[8192]{0}', space=vmem, size = 0x2000, scoped, tag = 'output window, operand 0, single buffered']
    #allocation3 [shape = 's32[1]{0}', space=sflag, size = 0x4, scoped, tag = 'scoped memory for tpu_custom_call.1']
    %10 = vsyncpa [#allocation3], 0
    // Predicated region
    $region2: #{tpu_custom_call.1} parent=1 // pred_check
      _
    $region3: #{tpu_custom_call.1} parent=1 // pred_check_branch
      %12 = sbr.rel (0) target = $region5
    $region4: #{tpu_custom_call.1} parent=1 // pred_region
      _
    $region5: #{tpu_custom_call.1} parent=1 // pred_fallthru
      _
    // Predicated region
    $region6: #{tpu_custom_call.1} parent=1 // pred_check
      _
    $region7: #{tpu_custom_call.1} parent=1 // pred_check_branch
      %14 = sbr.rel (0) target = $region9
    $region8: #{tpu_custom_call.1} parent=1 // pred_region
      _
    $region9: #{tpu_custom_call.1} parent=1 // pred_fallthru
      _
    // Predicated region
    $region10: #{tpu_custom_call.1} parent=1 // pred_check
      _
    $region11: #{tpu_custom_call.1} parent=1 // pred_check_branch
      %16 = sbr.rel (0) target = $region13
    $region12: #{tpu_custom_call.1} parent=1 // pred_region
      _
    $region13: #{tpu_custom_call.1} parent=1 // pred_fallthru
      _
    // Predicated region
    $region14: #{tpu_custom_call.1} parent=1 // pred_check
      _
    $region15: #{tpu_custom_call.1} parent=1 // pred_check_branch
      %18 = sbr.rel (0) target = $region17
    $region16: #{tpu_custom_call.1} parent=1 // pred_region
      _
    $region17: #{tpu_custom_call.1} parent=1 // pred_fallthru
      _
    // Predicated region
    $region18: #{tpu_custom_call.1} parent=1 // pred_check
      _
    $region19: #{tpu_custom_call.1} parent=1 // pred_check_branch
      %20 = sbr.rel (0) target = $region21
    $region20: #{tpu_custom_call.1} parent=1 // pred_region
      _
    $region21: #{tpu_custom_call.1} parent=1 // pred_fallthru
      _
    %v21 = vld [vmem:[%s0] sm:$0xff]
    %v22 = vld [vmem:[%s0 + $0x8] sm:$0xff]
    %v23 = vld [vmem:[%s1] sm:$0xff]
    %v24 = vld [vmem:[%s1 + $0x8] sm:$0xff]
    %v25 = vld [vmem:[%s1 + $0x10] sm:$0xff]
    %v26 = vld [vmem:[%s1 + $0x18] sm:$0xff]
    %v27 = vld [vmem:[%s2] sm:$0x1]
    %v29 = vperm.slane %v27, 0
    %vm31 = vcmask 261120
    %v33 = vsel %vm31, %v21, 0
    %v36 = vsel %vm31, %v22, 0
    %38 = vmatpush.msra.mxu0 0.0
    %39 = vmatpush.msra.mxu0 0.0
    %40 = vmatpush.msra.mxu0 0.0
    %41 = vmatpush.msra.mxu0 0.0
    %42 = vmatpush.msra.mxu0 0.0
    %43 = vmatpush.msra.mxu0 0.0
    %44 = vmatpush.msra.mxu0 0.0
    %45 = vmatpush.msra.mxu0 0.0
    %46 = vmatpush.msra.mxu0 0.0
    %47 = vmatpush.msra.mxu0 0.0
    %48 = vmatpush.msra.mxu0 0.0
    %49 = vmatpush.msra.mxu0 0.0
    %50 = vmatpush.msra.mxu0 %v26
    %51 = vmatpush.msra.mxu0 %v25
    %52 = vmatpush.msra.mxu0 %v24
    %53 = vmatpush.msra.mxu0 %v23
    %54 = vmatmul.f32.gmra.mxu0 %v33
    %v55 = vpop.f32.mrf.mxu0
    %v56 = vadd.f32 %v29, %v55
    %57 = vmatmul.f32.gmra.mxu0 %v36
    %v58 = vpop.f32.mrf.mxu0
    %v59 = vadd.f32 %v29, %v58
    %60 = vdwg.mxu0
    %v61 = vmax.f32 %v56, 0.0
    %v62 = vmax.f32 %v59, 0.0
    %v63 = vld [vmem:[%s3] sm:$0xff]
    %v64 = vld [vmem:[%s3 + $0x8] sm:$0xff]
    %v65 = vld [vmem:[%s3 + $0x10] sm:$0xff]
    %v66 = vld [vmem:[%s3 + $0x18] sm:$0xff]
    %v67 = vld [vmem:[%s3 + $0x20] sm:$0xff]
    %v68 = vld [vmem:[%s3 + $0x28] sm:$0xff]
    %v69 = vld [vmem:[%s3 + $0x30] sm:$0xff]
    %v70 = vld [vmem:[%s3 + $0x38] sm:$0xff]
    %v71 = vld [vmem:[%s3 + $0x40] sm:$0xff]
    %v72 = vld [vmem:[%s3 + $0x48] sm:$0xff]
    %v73 = vld [vmem:[%s3 + $0x50] sm:$0xff]
    %v74 = vld [vmem:[%s3 + $0x58] sm:$0xff]
    %v75 = vld [vmem:[%s3 + $0x60] sm:$0xff]
    %v76 = vld [vmem:[%s3 + $0x68] sm:$0xff]
    %v77 = vld [vmem:[%s3 + $0x70] sm:$0xff]
    %v78 = vld [vmem:[%s3 + $0x78] sm:$0xff]
    %v79 = vld [vmem:[%s4] sm:$0x1]
    %v81 = vperm.slane %v79, 0
    %83 = vmatpush.msra.mxu0 %v78
    %84 = vmatpush.msra.mxu0 %v77
    %85 = vmatpush.msra.mxu0 %v76
    %86 = vmatpush.msra.mxu0 %v75
    %87 = vmatpush.msra.mxu0 %v74
    %88 = vmatpush.msra.mxu0 %v73
    %89 = vmatpush.msra.mxu0 %v72
    %90 = vmatpush.msra.mxu0 %v71
    %91 = vmatpush.msra.mxu0 %v70
    %92 = vmatpush.msra.mxu0 %v69
    %93 = vmatpush.msra.mxu0 %v68
    %94 = vmatpush.msra.mxu0 %v67
    %95 = vmatpush.msra.mxu0 %v66
    %96 = vmatpush.msra.mxu0 %v65
    %97 = vmatpush.msra.mxu0 %v64
    %98 = vmatpush.msra.mxu0 %v63
    %99 = vmatmul.f32.gmra.mxu0 %v61
    %v100 = vpop.f32.mrf.mxu0
    %v101 = vadd.f32 %v81, %v100
    %102 = vmatmul.f32.gmra.mxu0 %v62
    %v103 = vpop.f32.mrf.mxu0
    %v104 = vadd.f32 %v81, %v103
    %105 = vdwg.mxu0
    %106 = vst.msk [vmem:[#allocation2] sm:$0xff] %vm31, %v101
    %107 = vst.msk [vmem:[#allocation2 + $0x8] sm:$0xff] %vm31, %v104
    // Predicated region
    $region22: #{tpu_custom_call.1} parent=1 // pred_check
      _
    $region23: #{tpu_custom_call.1} parent=1 // pred_check_branch
      %109 = sbr.rel (0) target = $region25
    $region24: #{tpu_custom_call.1} parent=1 // pred_region
      %111 = vsyncadd [#allocation3], 0
      %s112 = sshll.u32 [#allocation2], 4
      %s113 = int_to_ptr.vmem [resolvable:$true] %s112
      %s114 = sshll.u32 %s5, 4
      %s115 = int_to_ptr.hbm [resolvable:$true] %s114
      %120 = dma.vmem_to_hbm [thread:$0]  %s113, 256, %s115, [#allocation3], 128, 128, 8
    $region25: #{tpu_custom_call.1} parent=1 // pred_fallthru
      _
    // Predicated region
    $region26: #{tpu_custom_call.1} parent=1 // pred_check
      _
    $region27: #{tpu_custom_call.1} parent=1 // pred_check_branch
      %122 = sbr.rel (0) target = $region29
    $region28: #{tpu_custom_call.1} parent=1 // pred_region
      %124 = dma.done [#allocation3], 256
    $region29: #{tpu_custom_call.1} parent=1 // pred_fallthru
      _
    %125 = vsyncpa [#allocation3], 1

</llo_original>
